<compile_context>
chip_gen: v6e
topology: v6e:2x2x1
jax: 0.10.0
libtpu: 0.0.40
codegen_flags: <defaults>
</compile_context>

<pallas_src>
import functools

import jax
import jax.numpy as jnp
from jax.experimental import pallas as pl
from jax.experimental.pallas import tpu as pltpu


def _round_up(x: int, m: int) -> int:
    return (x + m - 1) // m * m


def _vmem_budget_bytes() -> int:
    """~80% of per-core physical VMEM; conservative v7x-safe fallback."""
    try:
        cap = int(pltpu.get_tpu_info().vmem_capacity_bytes)
    except Exception:
        cap = 64 * 1024 * 1024
    return int(cap * 0.8)


# --------------------------------------------------------------------------
# Kernels
# --------------------------------------------------------------------------
def _simple_nn_kernel(x_ref, w1_ref, b1_ref, w2_ref, b2_ref, o_ref):
    """Resident-weight path: one batch tile per grid step, weights stay in VMEM."""
    # fc1: [TB, In] @ [In, H_p] with f32 accumulation; f32 bias add + ReLU.
    h = jnp.dot(x_ref[...], w1_ref[...], preferred_element_type=jnp.float32)
    h = jnp.maximum(h + b1_ref[...], 0.0)
    # fc2: cast ReLU output to the (possibly bf16) operand dtype for the MXU.
    out = jnp.dot(h.astype(w2_ref.dtype), w2_ref[...],
                  preferred_element_type=jnp.float32)
    o_ref[...] = (out + b2_ref[...]).astype(o_ref.dtype)


def _simple_nn_htiled_kernel(x_ref, w1_ref, b1_ref, w2_ref, b2_ref, o_ref,
                             acc_ref):
    """Hidden-tiled path: stream w1/w2 over the hidden axis, accumulate in f32."""
    k = pl.program_id(1)

    @pl.when(k == 0)
    def _():
        acc_ref[...] = jnp.zeros_like(acc_ref)

    h = jnp.dot(x_ref[...], w1_ref[...], preferred_element_type=jnp.float32)
    h = jnp.maximum(h + b1_ref[...], 0.0)
    acc_ref[...] += jnp.dot(h.astype(w2_ref.dtype), w2_ref[...],
                            preferred_element_type=jnp.float32)

    @pl.when(k == pl.num_programs(1) - 1)
    def _():
        o_ref[...] = (acc_ref[...] + b2_ref[...]).astype(o_ref.dtype)


# --------------------------------------------------------------------------
# Parameter preparation
# --------------------------------------------------------------------------
def prepare_params(w1, b1, w2, b2, operand_dtype=jnp.bfloat16):
    """Zero-pad H/C to 128-lane multiples (exact) and cast weight operands.

    w1: [In, H], b1: [H], w2: [H, C], b2: [C]  (transposed vs. nn.Linear).
    In is NOT padded (it only ever appears as a full array dim).  Biases stay
    f32 (bias add / ReLU are done in f32 inside the kernel).
    """
    In, H = w1.shape
    C = w2.shape[1]
    H_p, C_p = _round_up(H, 128), _round_up(C, 128)

    w1p = jnp.zeros((In, H_p), operand_dtype).at[:, :H].set(
        w1.astype(operand_dtype))
    b1p = jnp.zeros((1, H_p), jnp.float32).at[:, :H].set(
        b1.reshape(1, -1).astype(jnp.float32))
    w2p = jnp.zeros((H_p, C_p), operand_dtype).at[:H, :C].set(
        w2.astype(operand_dtype))
    b2p = jnp.zeros((1, C_p), jnp.float32).at[:, :C].set(
        b2.reshape(1, -1).astype(jnp.float32))
    return w1p, b1p, w2p, b2p


# --------------------------------------------------------------------------
# Forward wrapper
# --------------------------------------------------------------------------
@functools.partial(
    jax.jit,
    static_argnames=("num_classes", "tile_b", "hidden_tile", "out_dtype",
                     "force_weight_tiling"))
def simple_nn_forward(x, w1p, b1p, w2p, b2p, *, num_classes, tile_b=1024,
                      hidden_tile=512, out_dtype=None,
                      force_weight_tiling=False):
    """x: [B, input_size]; padded params from prepare_params. Returns [B, C]."""
    In, H_p = w1p.shape
    C_p = w2p.shape[1]
    B = x.shape[0]
    assert x.shape[1] == In, "x feature dim must match w1's first dim"

    op_dtype = w1p.dtype
    op_bytes = jnp.dtype(op_dtype).itemsize
    if out_dtype is None:
        out_dtype = op_dtype
    out_bytes = jnp.dtype(out_dtype).itemsize

    # Cast activations to the operand dtype; no feature padding.
    x = x.astype(op_dtype)

    # Sublane tile: 16 rows for 2-byte operands, 8 for f32.
    sub = 16 if op_bytes == 2 else 8

    # --- VMEM budgeting ----------------------------------------------------
    budget = _vmem_budget_bytes()
    resident_w = (In * H_p + H_p * C_p) * op_bytes + (H_p + C_p) * 4
    use_tiling = bool(force_weight_tiling) or resident_w > int(0.4 * budget)

    TH = 128
    if use_tiling:
        cand = max(128, (min(hidden_tile, H_p) // 128) * 128)
        while cand >= 128:
            if H_p % cand == 0:
                TH = cand
                break
            cand -= 128
        weight_vmem = 2 * (In * TH + TH * C_p) * op_bytes + (H_p + C_p) * 4
        hid_cols = TH
    else:
        weight_vmem = resident_w
        hid_cols = H_p

    # Per batch-row VMEM: double-buffered x/out tiles + f32 hidden + f32 acc.
    per_row = (2 * In * op_bytes + 2 * C_p * out_bytes
               + hid_cols * 4 + C_p * 4)
    rows_fit = (budget - weight_vmem) // max(per_row, 1)
    tb_cap = max(sub, (min(tile_b, max(int(rows_fit), sub)) // sub) * sub)

    # Batch tile: multiple of `sub`, never larger than B, and >=2 grid steps
    # whenever the batch allows it (v7x 2-TC sharding of the "parallel" axis).
    if B <= sub:
        TB = B                      # single partial tile == full array dim
    else:
        TB = min(tb_cap, _round_up((B + 1) // 2, sub))
    B_p = _round_up(B, TB)
    if B_p != B:
        x = jnp.pad(x, ((0, B_p - B), (0, 0)))   # single pad, only when ragged
    nb = B_p // TB

    work = weight_vmem + TB * per_row
    vmem_limit = min(max(int(1.25 * work), 16 * 1024 * 1024), budget)

    cost = pl.CostEstimate(
        flops=2 * B_p * (In * H_p + H_p * C_p),
        transcendentals=0,
        bytes_accessed=(B_p * In * op_bytes + resident_w
                        + B_p * C_p * out_bytes),
    )

    if not use_tiling:
        out = pl.pallas_call(
            _simple_nn_kernel,
            out_shape=jax.ShapeDtypeStruct((B_p, C_p), out_dtype),
            grid=(nb,),
            in_specs=[
                pl.BlockSpec((TB, In), lambda i: (i, 0)),     # x: streamed
                pl.BlockSpec((In, H_p), lambda i: (0, 0)),    # w1: resident
                pl.BlockSpec((1, H_p), lambda i: (0, 0)),     # b1: resident
                pl.BlockSpec((H_p, C_p), lambda i: (0, 0)),   # w2: resident
                pl.BlockSpec((1, C_p), lambda i: (0, 0)),     # b2: resident
            ],
            out_specs=pl.BlockSpec((TB, C_p), lambda i: (i, 0)),  # lane-dense
            compiler_params=pltpu.CompilerParams(
                dimension_semantics=("parallel",),
                vmem_limit_bytes=vmem_limit,
            ),
            cost_estimate=cost,
        )(x, w1p, b1p, w2p, b2p)
    else:
        nh = H_p // TH
        out = pl.pallas_call(
            _simple_nn_htiled_kernel,
            out_shape=jax.ShapeDtypeStruct((B_p, C_p), out_dtype),
            grid=(nb, nh),
            in_specs=[
                pl.BlockSpec((TB, In), lambda i, k: (i, 0)),   # x
                pl.BlockSpec((In, TH), lambda i, k: (0, k)),   # w1 H-tile
                pl.BlockSpec((1, TH), lambda i, k: (0, k)),    # b1 H-tile
                pl.BlockSpec((TH, C_p), lambda i, k: (k, 0)),  # w2 H-tile
                pl.BlockSpec((1, C_p), lambda i, k: (0, 0)),   # b2
            ],
            out_specs=pl.BlockSpec((TB, C_p), lambda i, k: (i, 0)),
            scratch_shapes=[pltpu.VMEM((TB, C_p), jnp.float32)],
            compiler_params=pltpu.CompilerParams(
                dimension_semantics=("parallel", "arbitrary"),
                vmem_limit_bytes=vmem_limit,
            ),
            cost_estimate=cost,
        )(x, w1p, b1p, w2p, b2p)

    # Slice away class padding (and batch padding if any) outside the kernel.
    return out[:B, :num_classes]


# --------------------------------------------------------------------------
# Demo / self-test
# --------------------------------------------------------------------------
if __name__ == "__main__":
    def init_params(key, in_size, hidden, classes):
        kw1, kb1, kw2, kb2 = jax.random.split(key, 4)
        bound1 = 1.0 / (in_size ** 0.5)
        w1 = jax.random.uniform(kw1, (in_size, hidden),
                                minval=-bound1, maxval=bound1,
                                dtype=jnp.float32)
        b1 = jax.random.uniform(kb1, (hidden,),
                                minval=-bound1, maxval=bound1,
                                dtype=jnp.float32)
        bound2 = 1.0 / (hidden ** 0.5)
        w2 = jax.random.uniform(kw2, (hidden, classes),
                                minval=-bound2, maxval=bound2,
                                dtype=jnp.float32)
        b2 = jax.random.uniform(kb2, (classes,),
                                minval=-bound2, maxval=bound2,
                                dtype=jnp.float32)
        return w1, b1, w2, b2

    def ref_forward(x, w1, b1, w2, b2):
        return jnp.maximum(x @ w1 + b1, 0.0) @ w2 + b2

    key = jax.random.PRNGKey(0)
    kp, kx, kp2, kx2 = jax.random.split(key, 4)

    # --- Test 1: default bf16 operands, resident-weight path ---------------
    batch, input_size, hidden_size, num_classes = 8, 32, 64, 16
    w1, b1, w2, b2 = init_params(kp, input_size, hidden_size, num_classes)
    x = jax.random.normal(kx, (batch, input_size), dtype=jnp.float32)
    ref = ref_forward(x, w1, b1, w2, b2)

    pbf = prepare_params(w1, b1, w2, b2)                      # bf16 default
    out_bf = simple_nn_forward(x, *pbf, num_classes=num_classes)
    out_bf = jax.block_until_ready(out_bf)
    assert out_bf.shape == (batch, num_classes)
    assert jnp.allclose(out_bf.astype(jnp.float32), ref, atol=5e-2, rtol=5e-2)

    # --- Test 2: f32 operands / f32 output, exact vs. reference ------------
    p32 = prepare_params(w1, b1, w2, b2, operand_dtype=jnp.float32)
    out_32 = simple_nn_forward(x, *p32, num_classes=num_classes,
                               out_dtype=jnp.float32)
    out_32 = jax.block_until_ready(out_32)
    assert out_32.shape == (batch, num_classes)
    assert jnp.allclose(out_32, ref, atol=1e-5, rtol=1e-5)

    # --- Test 3: hidden-tiled fallback path (forced), multi-step grid ------
    batch2, hidden2 = 32, 256
    w1b, b1b, w2b, b2b = init_params(kp2, input_size, hidden2, num_classes)
    x2 = jax.random.normal(kx2, (batch2, input_size), dtype=jnp.float32)
    ref2 = ref_forward(x2, w1b, b1b, w2b, b2b)

    p32b = prepare_params(w1b, b1b, w2b, b2b, operand_dtype=jnp.float32)
    out_t = simple_nn_forward(x2, *p32b, num_classes=num_classes,
                              out_dtype=jnp.float32, hidden_tile=128,
                              force_weight_tiling=True)
    out_t = jax.block_until_ready(out_t)
    assert out_t.shape == (batch2, num_classes)
    assert jnp.allclose(out_t, ref2, atol=1e-5, rtol=1e-5)

    print("KERNEL_OK")
</pallas_src>

<mosaic_0001>
module attributes {stable_mosaic.version = 11 : i64} {
  func.func @_simple_nn_kernel(%arg0: i32, %arg1: memref<8x32xbf16, #tpu.memory_space<vmem>>, %arg2: memref<32x128xbf16, #tpu.memory_space<vmem>>, %arg3: memref<1x128xf32, #tpu.memory_space<vmem>>, %arg4: memref<128x128xbf16, #tpu.memory_space<vmem>>, %arg5: memref<1x128xf32, #tpu.memory_space<vmem>>, %arg6: memref<8x128xbf16, #tpu.memory_space<vmem>>) attributes {dimension_semantics = [#tpu.dimension_semantics<parallel>], iteration_bounds = array<i64: 1>, scalar_prefetch = 0 : i64, scratch_operands = 0 : i64, tpu.core_type = #tpu.core_type<tc>, window_params = [{transform_indices = @transform_0, window_bounds = array<i64: 8, 32>}, {pipeline_mode = #tpu.pipeline_mode<synchronous>, transform_indices = @transform_1, window_bounds = array<i64: 32, 128>}, {pipeline_mode = #tpu.pipeline_mode<synchronous>, transform_indices = @transform_2, window_bounds = array<i64: 1, 128>}, {pipeline_mode = #tpu.pipeline_mode<synchronous>, transform_indices = @transform_3, window_bounds = array<i64: 128, 128>}, {pipeline_mode = #tpu.pipeline_mode<synchronous>, transform_indices = @transform_4, window_bounds = array<i64: 1, 128>}, {transform_indices = @transform_5, window_bounds = array<i64: 8, 128>}]} {
    %c0 = arith.constant 0 : index
    %c0_0 = arith.constant 0 : index
    %0 = vector.load %arg1[%c0, %c0_0] : memref<8x32xbf16, #tpu.memory_space<vmem>>, vector<8x32xbf16>
    %c0_1 = arith.constant 0 : index
    %c0_2 = arith.constant 0 : index
    %1 = vector.load %arg2[%c0_1, %c0_2] : memref<32x128xbf16, #tpu.memory_space<vmem>>, vector<32x128xbf16>
    %cst = arith.constant dense<0.000000e+00> : vector<8x128xf32>
    %2 = tpu.matmul %0, %1, %cst {dimension_numbers = #tpu.dot_dimension_numbers<[1], [0], [0], [1], [0, 0, 1, 1], [], []>} : vector<8x32xbf16>, vector<32x128xbf16>, vector<8x128xf32> -> vector<8x128xf32>
    %c0_3 = arith.constant 0 : index
    %c0_4 = arith.constant 0 : index
    %3 = vector.load %arg3[%c0_3, %c0_4] : memref<1x128xf32, #tpu.memory_space<vmem>>, vector<1x128xf32>
    %4 = vector.broadcast %3 : vector<1x128xf32> to vector<8x128xf32>
    %5 = arith.addf %2, %4 : vector<8x128xf32>
    %cst_5 = arith.constant 0.000000e+00 : f32
    %6 = vector.broadcast %cst_5 : f32 to vector<8x128xf32>
    %7 = arith.maximumf %5, %6 : vector<8x128xf32>
    %8 = arith.truncf %7 : vector<8x128xf32> to vector<8x128xbf16>
    %c0_6 = arith.constant 0 : index
    %c0_7 = arith.constant 0 : index
    %9 = vector.load %arg4[%c0_6, %c0_7] : memref<128x128xbf16, #tpu.memory_space<vmem>>, vector<128x128xbf16>
    %cst_8 = arith.constant dense<0.000000e+00> : vector<8x128xf32>
    %10 = tpu.matmul %8, %9, %cst_8 {dimension_numbers = #tpu.dot_dimension_numbers<[1], [0], [0], [1], [0, 0, 1, 1], [], []>} : vector<8x128xbf16>, vector<128x128xbf16>, vector<8x128xf32> -> vector<8x128xf32>
    %c0_9 = arith.constant 0 : index
    %c0_10 = arith.constant 0 : index
    %11 = vector.load %arg5[%c0_9, %c0_10] : memref<1x128xf32, #tpu.memory_space<vmem>>, vector<1x128xf32>
    %12 = vector.broadcast %11 : vector<1x128xf32> to vector<8x128xf32>
    %13 = arith.addf %10, %12 : vector<8x128xf32>
    %14 = arith.truncf %13 : vector<8x128xf32> to vector<8x128xbf16>
    %c0_11 = arith.constant 0 : index
    %c0_12 = arith.constant 0 : index
    %15 = vector.load %arg6[%c0_11, %c0_12] : memref<8x128xbf16, #tpu.memory_space<vmem>>, vector<8x128xbf16>
    tpu.vector_store %arg6[%c0_11, %c0_12], %14 {strides = array<i32>} : memref<8x128xbf16, #tpu.memory_space<vmem>>, vector<8x128xbf16>,
    return
  }
  func.func @transform_0(%arg0: i32) -> (i32, i32) {
    %c0_i32 = arith.constant 0 : i32
    %c0_i32_0 = arith.constant 0 : i32
    return %arg0, %c0_i32 : i32, i32
  }
  func.func @transform_1(%arg0: i32) -> (i32, i32) {
    %c0_i32 = arith.constant 0 : i32
    %c0_i32_0 = arith.constant 0 : i32
    %c0_i32_1 = arith.constant 0 : i32
    return %c0_i32, %c0_i32_0 : i32, i32
  }
  func.func @transform_2(%arg0: i32) -> (i32, i32) {
    %c0_i32 = arith.constant 0 : i32
    %c0_i32_0 = arith.constant 0 : i32
    %c0_i32_1 = arith.constant 0 : i32
    return %c0_i32, %c0_i32_0 : i32, i32
  }
  func.func @transform_3(%arg0: i32) -> (i32, i32) {
    %c0_i32 = arith.constant 0 : i32
    %c0_i32_0 = arith.constant 0 : i32
    %c0_i32_1 = arith.constant 0 : i32
    return %c0_i32, %c0_i32_0 : i32, i32
  }
  func.func @transform_4(%arg0: i32) -> (i32, i32) {
    %c0_i32 = arith.constant 0 : i32
    %c0_i32_0 = arith.constant 0 : i32
    %c0_i32_1 = arith.constant 0 : i32
    return %c0_i32, %c0_i32_0 : i32, i32
  }
  func.func @transform_5(%arg0: i32) -> (i32, i32) {
    %c0_i32 = arith.constant 0 : i32
    %c0_i32_0 = arith.constant 0 : i32
    return %arg0, %c0_i32 : i32, i32
  }
}

</mosaic_0001>

<llo_original>
// kernel: simple_nn_forward.1
$region0: #{simple_nn_forward.1}
  #allocation0 [shape = 'u32[]', space=smem, size = 0x4, offset = 0x4, fixed_abs, tag = 'smem constant byte address 0x4 - core index']
  #allocation1 [shape = 'u32[144,128]{1,0:T(1,128)}', space=vmem, size = 0x12000, scoped, tag = 'internal scratch']
  %s0 = inlined_call_operand.vmem [shape: bf16[8,32], index: 0, kind: input, shape index: {}]
  %s1 = inlined_call_operand.hbm [shape: bf16[32,128], index: 1, kind: input, shape index: {}]
  %s2 = inlined_call_operand.vmem [shape: f32[1,128], index: 2, kind: input, shape index: {}]
  %s3 = inlined_call_operand.hbm [shape: bf16[128,128], index: 3, kind: input, shape index: {}]
  %s4 = inlined_call_operand.vmem [shape: f32[1,128], index: 4, kind: input, shape index: {}]
  %s5 = inlined_call_operand.hbm [shape: bf16[8,128], index: 5, kind: output, shape index: {}]
  %s6 = sld [smem:[#allocation0]]
  $region38: #{simple_nn_forward.1} parent=0
    _
  %s8 = ssub.s32 1, %s6
  %s9 = scalar_select 0, %s8, %s6
  $region1: #{simple_nn_forward.1} parent=0
    #allocation2 [shape = 'u8[8192]{0}', space=vmem, size = 0x2000, scoped, tag = 'input window, operand 1, single buffered']
    #allocation3 [shape = 's32[1]{0}', space=sflag, size = 0x4, scoped, tag = 'scoped memory for simple_nn_forward.1']
    #allocation4 [shape = 's32[1]{0}', space=sflag, size = 0x4, scoped, tag = 'scoped memory for simple_nn_forward.1']
    #allocation5 [shape = 'u8[32768]{0}', space=vmem, size = 0x8000, scoped, tag = 'input window, operand 3, single buffered']
    #allocation6 [shape = 's32[1]{0}', space=sflag, size = 0x4, scoped, tag = 'scoped memory for simple_nn_forward.1']
    #allocation7 [shape = 'u8[2048]{0}', space=vmem, size = 0x800, scoped, tag = 'output window, operand 0, single buffered']
    %10 = vsyncpa [#allocation3], 0
    %11 = vsyncpa [#allocation6], 0
    %12 = vsyncpa [#allocation4], 0
    // Predicated region
    $region2: #{simple_nn_forward.1} parent=1 // pred_check
      _
    $region3: #{simple_nn_forward.1} parent=1 // pred_check_branch
      %14 = sbr.rel (0) target = $region5
    $region4: #{simple_nn_forward.1} parent=1 // pred_region
      _
    $region5: #{simple_nn_forward.1} parent=1 // pred_fallthru
      _
    // Predicated region
    $region6: #{simple_nn_forward.1} parent=1 // pred_check
      _
    $region7: #{simple_nn_forward.1} parent=1 // pred_check_branch
      %16 = sbr.rel (0) target = $region9
    $region8: #{simple_nn_forward.1} parent=1 // pred_region
      %s18 = ssub.s32 256, 256
      %19 = vsyncadd [#allocation3], %s18
      %s20 = sshll.u32 [#allocation2], 4
      %s21 = int_to_ptr.vmem [resolvable:$true] %s20
      %26 = dma.hbm_to_vmem [thread:$0]  %s1, 256, %s21, [#allocation3], 64, 64, 4
    $region9: #{simple_nn_forward.1} parent=1 // pred_fallthru
      _
    // Predicated region
    $region10: #{simple_nn_forward.1} parent=1 // pred_check
      _
    $region11: #{simple_nn_forward.1} parent=1 // pred_check_branch
      %28 = sbr.rel (0) target = $region13
    $region12: #{simple_nn_forward.1} parent=1 // pred_region
      _
    $region13: #{simple_nn_forward.1} parent=1 // pred_fallthru
      _
    // Predicated region
    $region14: #{simple_nn_forward.1} parent=1 // pred_check
      _
    $region15: #{simple_nn_forward.1} parent=1 // pred_check_branch
      %30 = sbr.rel (0) target = $region17
    $region16: #{simple_nn_forward.1} parent=1 // pred_region
      %s32 = ssub.s32 1024, 1024
      %33 = vsyncadd [#allocation6], %s32
      %s34 = sshll.u32 [#allocation5], 4
      %s35 = int_to_ptr.vmem [resolvable:$true] %s34
      %40 = dma.hbm_to_vmem [thread:$0]  %s3, 1024, %s35, [#allocation6], 64, 64, 4
    $region17: #{simple_nn_forward.1} parent=1 // pred_fallthru
      _
    // Predicated region
    $region18: #{simple_nn_forward.1} parent=1 // pred_check
      _
    $region19: #{simple_nn_forward.1} parent=1 // pred_check_branch
      %42 = sbr.rel (0) target = $region21
    $region20: #{simple_nn_forward.1} parent=1 // pred_region
      _
    $region21: #{simple_nn_forward.1} parent=1 // pred_fallthru
      _
    // Predicated region
    $region22: #{simple_nn_forward.1} parent=1 // pred_check
      _
    $region23: #{simple_nn_forward.1} parent=1 // pred_check_branch
      %44 = sbr.rel (0) target = $region25
    $region24: #{simple_nn_forward.1} parent=1 // pred_region
      %45 = dma.done [#allocation3], 256
    $region25: #{simple_nn_forward.1} parent=1 // pred_fallthru
      _
    // Predicated region
    $region26: #{simple_nn_forward.1} parent=1 // pred_check
      _
    $region27: #{simple_nn_forward.1} parent=1 // pred_check_branch
      %47 = sbr.rel (0) target = $region29
    $region28: #{simple_nn_forward.1} parent=1 // pred_region
      %48 = dma.done [#allocation6], 1024
    $region29: #{simple_nn_forward.1} parent=1 // pred_fallthru
      _
    %v50 = vld [vmem:[%s0] sm:$0xf]
    %v51 = vld [vmem:[#allocation2] sm:$0xf]
    %v52 = vld [vmem:[#allocation2 + $0x4] sm:$0xf]
    %v53 = vld [vmem:[#allocation2 + $0x8] sm:$0xf]
    %v54 = vld [vmem:[#allocation2 + $0xc] sm:$0xf]
    %v55 = vld [vmem:[%s2] sm:$0x1]
    %v57 = vlaneseq
    %v58 = vshrl.u32 %v57, 7
    %v59 = vsub.s32 0, %v58
    %v60 = vrot.slane %v55, %v59
    %v66 = vunpack.c.l.b16 %v51
    %v67 = vunpack.c.l.b16 %v52
    %v68 = vunpack.c.l.b16 %v53
    %v69 = vunpack.c.l.b16 %v54
    %v70 = vpack.c.b16 %v67, %v66
    %v71 = vpack.c.b16 %v69, %v68
    %vm74 = vcmask 261120
    %v76 = vsel %vm74, %v50, 0
    %78 = vmatprep.subr.bf16.mxu0 0
    %79 = vmatpush1.bf16.msra.mxu0 0
    %80 = vmatprep.subr.bf16.mxu0 0
    %81 = vmatpush1.bf16.msra.mxu0 0
    %82 = vmatprep.subr.bf16.mxu0 0
    %83 = vmatpush1.bf16.msra.mxu0 0
    %84 = vmatprep.subr.bf16.mxu0 0
    %85 = vmatpush1.bf16.msra.mxu0 0
    %86 = vmatprep.subr.bf16.mxu0 0
    %87 = vmatpush1.bf16.msra.mxu0 0
    %88 = vmatprep.subr.bf16.mxu0 0
    %89 = vmatpush1.bf16.msra.mxu0 0
    %90 = vmatprep.subr.bf16.mxu0 0
    %91 = vmatpush1.bf16.msra.mxu0 %v71
    %92 = vmatprep.subr.bf16.mxu0 0
    %93 = vmatpush1.bf16.msra.mxu0 %v70
    %94 = vmatprep.subr.bf16.mxu0 0
    %95 = vmatpush2.bf16.msra.mxu0 0
    %96 = vmatprep.subr.bf16.mxu0 0
    %97 = vmatpush2.bf16.msra.mxu0 0
    %98 = vmatprep.subr.bf16.mxu0 0
    %99 = vmatpush2.bf16.msra.mxu0 0
    %100 = vmatprep.subr.bf16.mxu0 0
    %101 = vmatpush2.bf16.msra.mxu0 0
    %102 = vmatprep.subr.bf16.mxu0 0
    %103 = vmatpush2.bf16.msra.mxu0 0
    %104 = vmatprep.subr.bf16.mxu0 0
    %105 = vmatpush2.bf16.msra.mxu0 0
    %106 = vmatprep.subr.bf16.mxu0 0
    %107 = vmatpush2.bf16.msra.mxu0 0
    %108 = vmatprep.subr.bf16.mxu0 0
    %109 = vmatpush2.bf16.msra.mxu0 0
    %110 = vmatprep.mubr.bf16.mxu0 0
    %111 = vmatmul.mubr.bf16.gmra.mxu0 %v76
    %v112 = vpop.f32.mrf.mxu0
    %v113 = vadd.f32 %v60, %v112
    %v114 = vpop.f32.mrf.mxu0
    %v115 = vpop.f32.mrf.mxu0
    %v116 = vpop.f32.mrf.mxu0
    %117 = vdwg.mxu0
    %v118 = vmax.f32 %v113, 0.0
    %v119 = vpack.c.bf16 %v118, %v118
    %v120 = vld [vmem:[#allocation5] sm:$0xf]
    %v121 = vld [vmem:[#allocation5 + $0x4] sm:$0xf]
    %v122 = vld [vmem:[#allocation5 + $0x8] sm:$0xf]
    %v123 = vld [vmem:[#allocation5 + $0xc] sm:$0xf]
    %v124 = vld [vmem:[#allocation5 + $0x10] sm:$0xf]
    %v125 = vld [vmem:[#allocation5 + $0x14] sm:$0xf]
    %v126 = vld [vmem:[#allocation5 + $0x18] sm:$0xf]
    %v127 = vld [vmem:[#allocation5 + $0x1c] sm:$0xf]
    %v128 = vld [vmem:[#allocation5 + $0x20] sm:$0xf]
    %v129 = vld [vmem:[#allocation5 + $0x24] sm:$0xf]
    %v130 = vld [vmem:[#allocation5 + $0x28] sm:$0xf]
    %v131 = vld [vmem:[#allocation5 + $0x2c] sm:$0xf]
    %v132 = vld [vmem:[#allocation5 + $0x30] sm:$0xf]
    %v133 = vld [vmem:[#allocation5 + $0x34] sm:$0xf]
    %v134 = vld [vmem:[#allocation5 + $0x38] sm:$0xf]
    %v135 = vld [vmem:[#allocation5 + $0x3c] sm:$0xf]
    %v136 = vld [vmem:[%s4] sm:$0x1]
    %v138 = vlaneseq
    %v139 = vshrl.u32 %v138, 7
    %v140 = vsub.s32 0, %v139
    %v141 = vrot.slane %v136, %v140
    %v159 = vunpack.c.l.b16 %v120
    %v160 = vunpack.c.l.b16 %v121
    %v161 = vunpack.c.l.b16 %v122
    %v162 = vunpack.c.l.b16 %v123
    %v163 = vunpack.c.l.b16 %v124
    %v164 = vunpack.c.l.b16 %v125
    %v165 = vunpack.c.l.b16 %v126
    %v166 = vunpack.c.l.b16 %v127
    %v167 = vunpack.c.l.b16 %v128
    %v168 = vunpack.c.l.b16 %v129
    %v169 = vunpack.c.l.b16 %v130
    %v170 = vunpack.c.l.b16 %v131
    %v171 = vunpack.c.l.b16 %v132
    %v172 = vunpack.c.l.b16 %v133
    %v173 = vunpack.c.l.b16 %v134
    %v174 = vunpack.c.l.b16 %v135
    %v175 = vpack.c.b16 %v160, %v159
    %v176 = vpack.c.b16 %v162, %v161
    %v177 = vpack.c.b16 %v164, %v163
    %v178 = vpack.c.b16 %v166, %v165
    %v179 = vpack.c.b16 %v168, %v167
    %v180 = vpack.c.b16 %v170, %v169
    %v181 = vpack.c.b16 %v172, %v171
    %v182 = vpack.c.b16 %v174, %v173
    %191 = vmatprep.subr.bf16.mxu0 0
    %192 = vmatpush1.bf16.msra.mxu0 %v182
    %193 = vmatprep.subr.bf16.mxu0 0
    %194 = vmatpush1.bf16.msra.mxu0 %v181
    %195 = vmatprep.subr.bf16.mxu0 0
    %196 = vmatpush1.bf16.msra.mxu0 %v180
    %197 = vmatprep.subr.bf16.mxu0 0
    %198 = vmatpush1.bf16.msra.mxu0 %v179
    %199 = vmatprep.subr.bf16.mxu0 0
    %200 = vmatpush1.bf16.msra.mxu0 %v178
    %201 = vmatprep.subr.bf16.mxu0 0
    %202 = vmatpush1.bf16.msra.mxu0 %v177
    %203 = vmatprep.subr.bf16.mxu0 0
    %204 = vmatpush1.bf16.msra.mxu0 %v176
    %205 = vmatprep.subr.bf16.mxu0 0
    %206 = vmatpush1.bf16.msra.mxu0 %v175
    %207 = vmatprep.subr.bf16.mxu0 0
    %208 = vmatpush2.bf16.msra.mxu0 0
    %209 = vmatprep.subr.bf16.mxu0 0
    %210 = vmatpush2.bf16.msra.mxu0 0
    %211 = vmatprep.subr.bf16.mxu0 0
    %212 = vmatpush2.bf16.msra.mxu0 0
    %213 = vmatprep.subr.bf16.mxu0 0
    %214 = vmatpush2.bf16.msra.mxu0 0
    %215 = vmatprep.subr.bf16.mxu0 0
    %216 = vmatpush2.bf16.msra.mxu0 0
    %217 = vmatprep.subr.bf16.mxu0 0
    %218 = vmatpush2.bf16.msra.mxu0 0
    %219 = vmatprep.subr.bf16.mxu0 0
    %220 = vmatpush2.bf16.msra.mxu0 0
    %221 = vmatprep.subr.bf16.mxu0 0
    %222 = vmatpush2.bf16.msra.mxu0 0
    %223 = vmatprep.mubr.bf16.mxu0 0
    %224 = vmatmul.mubr.bf16.gmra.mxu0 %v119
    %v225 = vpop.f32.mrf.mxu0
    %v226 = vadd.f32 %v141, %v225
    %v227 = vpop.f32.mrf.mxu0
    %v228 = vpop.f32.mrf.mxu0
    %v229 = vpop.f32.mrf.mxu0
    %230 = vdwg.mxu0
    %v231 = vpack.c.bf16 %v226, %v226
    %232 = vst [vmem:[#allocation7] sm:$0xf] %v231
    // Predicated region
    $region30: #{simple_nn_forward.1} parent=1 // pred_check
      _
    $region31: #{simple_nn_forward.1} parent=1 // pred_check_branch
      %234 = sbr.rel (0) target = $region33
    $region32: #{simple_nn_forward.1} parent=1 // pred_region
      %s236 = ssub.s32 64, 64
      %237 = vsyncadd [#allocation4], %s236
      %s239 = sshll.u32 [#allocation7], 4
      %s240 = int_to_ptr.vmem [resolvable:$true] %s239
      %242 = dma.vmem_to_hbm [thread:$0]  %s240, 64, %s5, [#allocation4]
    $region33: #{simple_nn_forward.1} parent=1 // pred_fallthru
      _
    // Predicated region
    $region34: #{simple_nn_forward.1} parent=1 // pred_check
      _
    $region35: #{simple_nn_forward.1} parent=1 // pred_check_branch
      %244 = sbr.rel (0) target = $region37
    $region36: #{simple_nn_forward.1} parent=1 // pred_region
      %245 = dma.done [#allocation4], 64
    $region37: #{simple_nn_forward.1} parent=1 // pred_fallthru
      _
    %246 = vsyncpa [#allocation3], 1
    %247 = vsyncpa [#allocation6], 1
    %248 = vsyncpa [#allocation4], 1

</llo_original>
